<compile_context>
chip_gen: v7x
topology: tpu7x:2x2x1
jax: 0.10.0
libtpu: 0.0.40
codegen_flags: <defaults>
</compile_context>

<pallas_src>
import warnings

import jax
import jax.numpy as jnp
from jax.experimental import pallas as pl
from jax.experimental.pallas import tpu as pltpu

_SQRT_HALF = 0.7071067811865476
_BN_EPS = 1e-5
_LN_EPS = 1e-5
_DEF_BM = 512                      # row tile for mem-bound row-tiled kernels
_STORE_DTYPE = jnp.bfloat16        # activation / matmul-weight storage dtype
                                   # (set to jnp.float32 for closer torch parity)


def _default_vmem_limit():
    try:
        cap = int(pltpu.get_tpu_info().vmem_capacity_bytes)
    except Exception:
        cap = 128 * 1024 * 1024
    if cap <= 64 * 1024 * 1024:          # v7x-class parts: leave headroom
        return cap // 2
    return min(96 * 1024 * 1024, (cap * 3) // 4)


_VMEM_LIMIT = _default_vmem_limit()


def _probe_erf_support():
    def k(x_ref, o_ref):
        o_ref[...] = jax.lax.erf(x_ref[...])
    try:
        y = pl.pallas_call(k, out_shape=jax.ShapeDtypeStruct((8, 128), jnp.float32))(
            jnp.zeros((8, 128), jnp.float32))
        jax.block_until_ready(y)
        return True
    except Exception:
        warnings.warn("lax.erf did not lower on this backend; falling back to "
                      "tanh-approx GELU (numerics differ slightly from torch).")
        return False


_USE_ERF_GELU = _probe_erf_support()


def _gelu(x):
    if _USE_ERF_GELU:
        # exact (erf-based) GELU -- matches torch.nn.GELU() default
        return 0.5 * x * (1.0 + jax.lax.erf(x * _SQRT_HALF))
    c = 0.7978845608028654
    return 0.5 * x * (1.0 + jnp.tanh(c * (x + 0.044715 * x * x * x)))


def _cparams(*sems):
    return pltpu.CompilerParams(dimension_semantics=tuple(sems),
                                vmem_limit_bytes=_VMEM_LIMIT)


def _row_plan(M, target=_DEF_BM):
    """Row tile + grid size: whole M when small, else `target` with a ragged
    last block handled by Pallas (no wrapper-side pad / slice copies)."""
    bm = M if M <= target else target
    return bm, pl.cdiv(M, bm)


# --------------------------------------------------------------------------
# Row-tiled LayerNorm / matmul kernels
# --------------------------------------------------------------------------

def _ln_kernel(x_ref, g_ref, b_ref, o_ref):
    x = x_ref[...].astype(jnp.float32)
    mu = jnp.mean(x, axis=-1, keepdims=True)
    xc = x - mu
    var = jnp.mean(xc * xc, axis=-1, keepdims=True)
    y = xc * jax.lax.rsqrt(var + _LN_EPS)
    o_ref[...] = (y * g_ref[...] + b_ref[...]).astype(o_ref.dtype)


def layernorm(x, g, b, block_m=_DEF_BM):
    M, C = x.shape
    bm, nm = _row_plan(M, block_m)
    return pl.pallas_call(
        _ln_kernel,
        out_shape=jax.ShapeDtypeStruct((M, C), x.dtype),
        grid=(nm,),
        in_specs=[pl.BlockSpec((bm, C), lambda i: (i, 0)),
                  pl.BlockSpec((1, C), lambda i: (0, 0)),
                  pl.BlockSpec((1, C), lambda i: (0, 0))],
        out_specs=pl.BlockSpec((bm, C), lambda i: (i, 0)),
        compiler_params=_cparams("parallel"),
    )(x, g.reshape(1, C), b.reshape(1, C))


def _linear_ln_kernel(x_ref, w_ref, b_ref, g_ref, beta_ref, o_ref):
    y = jnp.dot(x_ref[...], w_ref[...],
                preferred_element_type=jnp.float32) + b_ref[...]
    mu = jnp.mean(y, axis=-1, keepdims=True)
    yc = y - mu
    var = jnp.mean(yc * yc, axis=-1, keepdims=True)
    y = yc * jax.lax.rsqrt(var + _LN_EPS) * g_ref[...] + beta_ref[...]
    o_ref[...] = y.astype(o_ref.dtype)


def linear_ln(x, w, b, g, beta, block_m=_DEF_BM):
    """Fused (x @ w + b) followed by LayerNorm over the output channels."""
    M, K = x.shape
    N = w.shape[1]
    bm, nm = _row_plan(M, block_m)
    return pl.pallas_call(
        _linear_ln_kernel,
        out_shape=jax.ShapeDtypeStruct((M, N), x.dtype),
        grid=(nm,),
        in_specs=[pl.BlockSpec((bm, K), lambda i: (i, 0)),
                  pl.BlockSpec((K, N), lambda i: (0, 0)),
                  pl.BlockSpec((1, N), lambda i: (0, 0)),
                  pl.BlockSpec((1, N), lambda i: (0, 0)),
                  pl.BlockSpec((1, N), lambda i: (0, 0))],
        out_specs=pl.BlockSpec((bm, N), lambda i: (i, 0)),
        compiler_params=_cparams("parallel"),
    )(x, w, b.reshape(1, N), g.reshape(1, N), beta.reshape(1, N))


def _proj2_kernel(a_ref, c_ref, wa_ref, wc_ref, b_ref, o_ref):
    y = jnp.dot(a_ref[...], wa_ref[...], preferred_element_type=jnp.float32)
    y = y + jnp.dot(c_ref[...], wc_ref[...], preferred_element_type=jnp.float32)
    o_ref[...] = (y + b_ref[...]).astype(o_ref.dtype)


def proj_concat(a, c, wa, wc, b, block_m=_DEF_BM):
    """proj(concat([a, c], -1)) without materializing the concat in HBM."""
    M = a.shape[0]
    Ka, N = wa.shape
    Kc = wc.shape[0]
    bm, nm = _row_plan(M, block_m)
    return pl.pallas_call(
        _proj2_kernel,
        out_shape=jax.ShapeDtypeStruct((M, N), a.dtype),
        grid=(nm,),
        in_specs=[pl.BlockSpec((bm, Ka), lambda i: (i, 0)),
                  pl.BlockSpec((bm, Kc), lambda i: (i, 0)),
                  pl.BlockSpec((Ka, N), lambda i: (0, 0)),
                  pl.BlockSpec((Kc, N), lambda i: (0, 0)),
                  pl.BlockSpec((1, N), lambda i: (0, 0))],
        out_specs=pl.BlockSpec((bm, N), lambda i: (i, 0)),
        compiler_params=_cparams("parallel"),
    )(a, c, wa, wc, b.reshape(1, N))


def _mlp_kernel(x_ref, g_ref, b_ref, w1_ref, b1_ref, w2_ref, b2_ref, o_ref):
    x = x_ref[...].astype(jnp.float32)
    mu = jnp.mean(x, axis=-1, keepdims=True)
    xc = x - mu
    var = jnp.mean(xc * xc, axis=-1, keepdims=True)
    xn = xc * jax.lax.rsqrt(var + _LN_EPS) * g_ref[...] + b_ref[...]
    h = _gelu(jnp.dot(xn.astype(w1_ref.dtype), w1_ref[...],
                      preferred_element_type=jnp.float32) + b1_ref[...])
    y = jnp.dot(h.astype(w2_ref.dtype), w2_ref[...],
                preferred_element_type=jnp.float32) + b2_ref[...]
    o_ref[...] = (x + y).astype(o_ref.dtype)


def mlp_block(x, g, beta, w1, b1, w2, b2, block_m=_DEF_BM):
    """Fused x + fc2(GELU(fc1(LayerNorm(x)))) (norm2 + Mlp + residual)."""
    M, C = x.shape
    Hd = w1.shape[1]
    bm, nm = _row_plan(M, block_m)
    return pl.pallas_call(
        _mlp_kernel,
        out_shape=jax.ShapeDtypeStruct((M, C), x.dtype),
        grid=(nm,),
        in_specs=[pl.BlockSpec((bm, C), lambda i: (i, 0)),
                  pl.BlockSpec((1, C), lambda i: (0, 0)),
                  pl.BlockSpec((1, C), lambda i: (0, 0)),
                  pl.BlockSpec((C, Hd), lambda i: (0, 0)),
                  pl.BlockSpec((1, Hd), lambda i: (0, 0)),
                  pl.BlockSpec((Hd, C), lambda i: (0, 0)),
                  pl.BlockSpec((1, C), lambda i: (0, 0))],
        out_specs=pl.BlockSpec((bm, C), lambda i: (i, 0)),
        compiler_params=_cparams("parallel"),
    )(x, g.reshape(1, C), beta.reshape(1, C), w1, b1.reshape(1, Hd),
      w2, b2.reshape(1, C))


# --------------------------------------------------------------------------
# Depthwise conv + BN + GELU, fused with GAP and the channel-interaction MLP
# --------------------------------------------------------------------------

def _make_dwconv_gap_ci_kernel(H, W, ksize):
    inv_hw = 1.0 / float(H * W)

    def kernel(x_ref, w_ref, s_ref, t_ref, w1_ref, s1_ref, t1_ref,
               w2_ref, b2_ref, o_ref, ci_ref):
        xv = x_ref[...].astype(jnp.float32)          # (1, H+2p, W+2p, C)
        wv = w_ref[...].astype(jnp.float32)          # (k, k, C)
        # hoist the k sublane(W)-misaligned shifts out of the tap loop:
        # k shifted copies instead of k*k.
        xw = [xv[:, :, dw:dw + W, :] for dw in range(ksize)]
        acc = jnp.zeros(o_ref.shape, jnp.float32)    # (1, H, W, C)
        for dh in range(ksize):
            for dw in range(ksize):
                acc = acc + xw[dw][:, dh:dh + H, :, :] * wv[dh, dw]
        y = _gelu(acc * s_ref[...] + t_ref[...])     # conv bias + eval BN folded
        o_ref[...] = y.astype(o_ref.dtype)
        # fused global average pool + channel-interaction MLP (1x1 convs)
        pooled = jnp.sum(jnp.sum(y, axis=1), axis=1) * inv_hw          # (1, C)
        h = _gelu(jnp.dot(pooled, w1_ref[...], preferred_element_type=jnp.float32)
                  * s1_ref[...] + t1_ref[...])                          # (1, C/8)
        ci = jnp.dot(h, w2_ref[...], preferred_element_type=jnp.float32) + b2_ref[...]
        ci_ref[...] = ci[:, None, :].astype(ci_ref.dtype)               # (1,1,C/2)

    return kernel


def dwconv_bn_gelu_gap_ci(x, w, s, t, ci1_w, ci1_s, ci1_t, ci2_w, ci2_b, ksize=3):
    """x: (B, H, W, C) NHWC. Returns (conv_out (B,H,W,C), ci logits (B,1,C//2))."""
    B, H, W, C = x.shape
    d8 = ci1_w.shape[1]
    co = ci2_w.shape[1]
    pad = ksize // 2
    xp = jnp.pad(x, ((0, 0), (pad, pad), (pad, pad), (0, 0)))
    Hp, Wp = H + 2 * pad, W + 2 * pad
    # TODO(synk): for very large feature maps (v7x 64 MiB VMEM) tile over H rows
    # with a (ksize-1)-row halo, carrying the GAP as an accumulator over an
    # extra "arbitrary" grid axis.
    return pl.pallas_call(
        _make_dwconv_gap_ci_kernel(H, W, ksize),
        out_shape=(jax.ShapeDtypeStruct((B, H, W, C), x.dtype),
                   jax.ShapeDtypeStruct((B, 1, co), jnp.float32)),
        grid=(B,),
        in_specs=[pl.BlockSpec((1, Hp, Wp, C), lambda b: (b, 0, 0, 0)),
                  pl.BlockSpec((ksize, ksize, C), lambda b: (0, 0, 0)),
                  pl.BlockSpec((1, 1, 1, C), lambda b: (0, 0, 0, 0)),
                  pl.BlockSpec((1, 1, 1, C), lambda b: (0, 0, 0, 0)),
                  pl.BlockSpec((C, d8), lambda b: (0, 0)),
                  pl.BlockSpec((1, d8), lambda b: (0, 0)),
                  pl.BlockSpec((1, d8), lambda b: (0, 0)),
                  pl.BlockSpec((d8, co), lambda b: (0, 0)),
                  pl.BlockSpec((1, co), lambda b: (0, 0))],
        out_specs=(pl.BlockSpec((1, H, W, C), lambda b: (b, 0, 0, 0)),
                   pl.BlockSpec((1, 1, co), lambda b: (b, 0, 0))),
        compiler_params=_cparams("parallel"),
    )(xp, w, s.reshape(1, 1, 1, C), t.reshape(1, 1, 1, C),
      ci1_w, ci1_s.reshape(1, d8), ci1_t.reshape(1, d8), ci2_w, ci2_b.reshape(1, co))


# --------------------------------------------------------------------------
# Fused qkv + windowed attention + channel gate + attn_norm
# --------------------------------------------------------------------------

def _make_attn_kernel(nh, hd, C, wg):
    def kernel(x_ref, wq_ref, wk_ref, wv_ref, bq_ref, bk_ref, bv_ref,
               ci_ref, bias_ref, g_ref, beta_ref, raw_ref, norm_ref):
        x = x_ref[...]                                           # (wg, N, C)
        sd = x.dtype
        # qkv projection fused here (no 3C-wide HBM round trip); weights are
        # tiny (C x C) so broadcasting them over the window group keeps us on
        # the canonical batched-matmul lowering path.
        wq = jnp.broadcast_to(wq_ref[...], (wg,) + wq_ref.shape)
        wk = jnp.broadcast_to(wk_ref[...], (wg,) + wk_ref.shape)
        wv = jnp.broadcast_to(wv_ref[...], (wg,) + wv_ref.shape)
        q = jnp.einsum("wnc,wcd->wnd", x, wq,
                       preferred_element_type=jnp.float32) + bq_ref[...]
        k = jnp.einsum("wnc,wcd->wnd", x, wk,
                       preferred_element_type=jnp.float32) + bk_ref[...]
        v = jnp.einsum("wnc,wcd->wnd", x, wv,
                       preferred_element_type=jnp.float32) + bv_ref[...]
        # channel-interaction gate on v (per batch & channel, broadcast over
        # windows/tokens) exactly as the reference: v = v * sigmoid(ci)
        v = v * jax.nn.sigmoid(ci_ref[...].astype(jnp.float32))
        # fold heads into the batch axis of one QK^T / PV einsum pair
        qh = jnp.concatenate([q[:, :, h * hd:(h + 1) * hd] for h in range(nh)],
                             axis=0).astype(sd)                  # (nh*wg, N, hd)
        kh = jnp.concatenate([k[:, :, h * hd:(h + 1) * hd] for h in range(nh)],
                             axis=0).astype(sd)
        vh = jnp.concatenate([v[:, :, h * hd:(h + 1) * hd] for h in range(nh)],
                             axis=0).astype(sd)
        a = jnp.einsum("bnd,bmd->bnm", qh, kh,
                       preferred_element_type=jnp.float32)       # (nh*wg, N, N)
        N = a.shape[-1]
        a = a.reshape(nh, wg, N, N) + bias_ref[...][:, None]     # rel-pos bias
        a = a.reshape(nh * wg, N, N)
        a = a - jnp.max(a, axis=-1, keepdims=True)
        e = jnp.exp(a)
        # TODO(synk): approx reciprocal (~1e-3 rel err); use approx=False for
        # bit-closer parity with the torch softmax.
        p = e * pl.reciprocal(jnp.sum(e, axis=-1, keepdims=True), approx=True)
        oh = jnp.einsum("bnm,bmd->bnd", p.astype(sd), vh,
                        preferred_element_type=jnp.float32)      # (nh*wg, N, hd)
        # lane-dense (full-C) reassembly; raw_ref is written exactly once
        o = jnp.concatenate([oh[h * wg:(h + 1) * wg] for h in range(nh)], axis=-1)
        raw_ref[...] = o.astype(raw_ref.dtype)
        # fused attn_norm computed from the local value (no VMEM read-back)
        mu = jnp.mean(o, axis=-1, keepdims=True)
        oc = o - mu
        var = jnp.mean(oc * oc, axis=-1, keepdims=True)
        on = oc * jax.lax.rsqrt(var + _LN_EPS) * g_ref[...] + beta_ref[...]
        norm_ref[...] = on.astype(norm_ref.dtype)
    return kernel


def _pick_window_group(n_win, tokens, target_rows=256):
    """Largest divisor of n_win giving >= ~target_rows effective matmul rows."""
    cap = min(n_win, max(1, -(-target_rows // tokens)))
    for d in range(cap, 0, -1):
        if n_win % d == 0:
            return d
    return 1


def window_attention(x_atten, ci, wq, wk, wv, bq, bk, bv, bias, g, beta, *,
                     num_heads, n_win):
    """x_atten: (B_, N, C) attention-branch activations (q scale folded into wq).
    ci: (B, 1, C) channel-interaction logits (sigmoid in-kernel, broadcast over
    this batch's windows via the index_map). bias: (num_heads, N, N).
    Returns (gated raw attention output, attn_norm of it), both (B_, N, C)."""
    B_, N, C = x_atten.shape
    hd = C // num_heads
    B = B_ // n_win
    wg = _pick_window_group(n_win, N)
    gpb = n_win // wg
    blk = pl.BlockSpec((wg, N, C), lambda b, t: (b * gpb + t, 0, 0))
    vec = lambda z: z.reshape(1, 1, -1)
    return pl.pallas_call(
        _make_attn_kernel(num_heads, hd, C, wg),
        out_shape=(jax.ShapeDtypeStruct((B_, N, C), x_atten.dtype),
                   jax.ShapeDtypeStruct((B_, N, C), x_atten.dtype)),
        grid=(B, gpb),
        in_specs=[blk,
                  pl.BlockSpec((C, C), lambda b, t: (0, 0)),
                  pl.BlockSpec((C, C), lambda b, t: (0, 0)),
                  pl.BlockSpec((C, C), lambda b, t: (0, 0)),
                  pl.BlockSpec((1, 1, C), lambda b, t: (0, 0, 0)),
                  pl.BlockSpec((1, 1, C), lambda b, t: (0, 0, 0)),
                  pl.BlockSpec((1, 1, C), lambda b, t: (0, 0, 0)),
                  pl.BlockSpec((1, 1, C), lambda b, t: (b, 0, 0)),
                  pl.BlockSpec((num_heads, N, N), lambda b, t: (0, 0, 0)),
                  pl.BlockSpec((1, 1, C), lambda b, t: (0, 0, 0)),
                  pl.BlockSpec((1, 1, C), lambda b, t: (0, 0, 0))],
        out_specs=(blk, blk),
        compiler_params=_cparams("parallel", "parallel"),
    )(x_atten, wq, wk, wv, vec(bq), vec(bk), vec(bv), ci, bias, vec(g), vec(beta))


# --------------------------------------------------------------------------
# Spatial interaction + sigmoid gate + conv-branch projection + conv_norm
# --------------------------------------------------------------------------

def _gate_kernel(xs_ref, xc_ref, pw_ref, pb_ref, w1_ref, s1_ref, t1_ref,
                 w2_ref, b2_ref, cs_ref, ct_ref, o_ref):
    xs = xs_ref[0]                                   # (T, C) attention branch
    xc = xc_ref[0]                                   # (T, dim) dwconv branch
    # conv-branch 1x1 projection (dim -> dim//2), fused
    proj = jnp.dot(xc, pw_ref[...], preferred_element_type=jnp.float32) + pb_ref[...]
    h = _gelu(jnp.dot(xs, w1_ref[...], preferred_element_type=jnp.float32)
              * s1_ref[...] + t1_ref[...])           # (T, dim//16)
    # second spatial_interaction 1x1 conv has one output channel: do it as a
    # lane reduction so the width-1 map never hits HBM (no masked vst).
    si = jnp.sum(h * w2_ref[...], axis=-1, keepdims=True) + b2_ref[...]   # (T, 1)
    y = jax.nn.sigmoid(si) * proj
    y = y * cs_ref[...] + ct_ref[...]                # eval-mode conv_norm (BN)
    o_ref[0] = y.astype(o_ref.dtype)


def spatial_gate(x_spatial, x_cnn, proj_w, proj_b, w1, s1, t1, w2, b2,
                 cn_s, cn_t, block_hw=_DEF_BM):
    """Fused projection -> spatial_interaction -> sigmoid gate -> conv_norm."""
    B, HW, C = x_spatial.shape
    dim = x_cnn.shape[-1]
    d16 = w1.shape[1]
    bt, nt = _row_plan(HW, block_hw)
    return pl.pallas_call(
        _gate_kernel,
        out_shape=jax.ShapeDtypeStruct((B, HW, C), x_spatial.dtype),
        grid=(B, nt),
        in_specs=[pl.BlockSpec((1, bt, C), lambda b, t: (b, t, 0)),
                  pl.BlockSpec((1, bt, dim), lambda b, t: (b, t, 0)),
                  pl.BlockSpec((dim, C), lambda b, t: (0, 0)),
                  pl.BlockSpec((1, C), lambda b, t: (0, 0)),
                  pl.BlockSpec((C, d16), lambda b, t: (0, 0)),
                  pl.BlockSpec((1, d16), lambda b, t: (0, 0)),
                  pl.BlockSpec((1, d16), lambda b, t: (0, 0)),
                  pl.BlockSpec((1, d16), lambda b, t: (0, 0)),
                  pl.BlockSpec((1, 1), lambda b, t: (0, 0)),
                  pl.BlockSpec((1, C), lambda b, t: (0, 0)),
                  pl.BlockSpec((1, C), lambda b, t: (0, 0))],
        out_specs=pl.BlockSpec((1, bt, C), lambda b, t: (b, t, 0)),
        compiler_params=_cparams("parallel", "parallel"),
    )(x_spatial, x_cnn, proj_w, proj_b.reshape(1, C), w1, s1.reshape(1, d16),
      t1.reshape(1, d16), w2.reshape(1, d16), b2.reshape(1, 1),
      cn_s.reshape(1, C), cn_t.reshape(1, C))


# --------------------------------------------------------------------------
# Plain-JAX glue (layout shuffles, parameter prep)
# --------------------------------------------------------------------------

def window_partition_nhwc(x, ws):
    B, H, W, C = x.shape
    x = x.reshape(B, H // ws, ws, W // ws, ws, C).transpose(0, 1, 3, 2, 4, 5)
    return x.reshape(-1, ws * ws, C)


def window_reverse_nhwc(windows, ws, H, W, C):
    x = windows.reshape(-1, H // ws, W // ws, ws, ws, C).transpose(0, 1, 3, 2, 4, 5)
    return x.reshape(-1, H, W, C)


def rel_pos_bias(table, ws, nh):
    coords = jnp.stack(jnp.meshgrid(jnp.arange(ws), jnp.arange(ws), indexing="ij"))
    cf = coords.reshape(2, -1)
    rel = (cf[:, :, None] - cf[:, None, :]).transpose(1, 2, 0)
    rel = rel.at[:, :, 0].add(ws - 1)
    rel = rel.at[:, :, 1].add(ws - 1)
    rel = rel.at[:, :, 0].multiply(2 * ws - 1)
    idx = rel.sum(-1).reshape(-1)
    bias = table[idx].reshape(ws * ws, ws * ws, nh)
    return bias.transpose(2, 0, 1).astype(jnp.float32)           # (nh, N, N)


def mixing_attention(x_win, H, W, p):
    """x_win: (num_windows*B, N, dim); H, W: (padded) spatial resolution."""
    B_, N, dim = x_win.shape
    C_attn = dim // 2
    nh = p["num_heads"]
    ws = p["window_size"]
    n_win = (H // ws) * (W // ws)
    B = B_ // n_win

    xf = x_win.reshape(B_ * N, dim)

    # branch projections, each fused with its LayerNorm
    x_atten = linear_ln(xf, p["proj_attn_w"], p["proj_attn_b"],
                        p["proj_attn_norm_g"], p["proj_attn_norm_b"])
    x_cnn = linear_ln(xf, p["proj_cnn_w"], p["proj_cnn_b"],
                      p["proj_cnn_norm_g"], p["proj_cnn_norm_b"])
    x_cnn = window_reverse_nhwc(x_cnn.reshape(B_, N, dim), ws, H, W, dim)

    # depthwise conv + BN + GELU fused with GAP + channel-interaction MLP
    x_cnn, ci = dwconv_bn_gelu_gap_ci(
        x_cnn, p["dw_w"], p["dw_s"], p["dw_t"],
        p["ci1_w"], p["ci1_s"], p["ci1_t"], p["ci2_w"], p["ci2_b"],
        ksize=p["dwconv_kernel_size"])

    # fused qkv + windowed attention + v channel gate + attn_norm
    attn_raw, attn_normed = window_attention(
        x_atten.reshape(B_, N, C_attn), ci,
        p["wq"], p["wk"], p["wv"], p["bq"], p["bk"], p["bv"],
        p["rel_bias"], p["attn_norm_g"], p["attn_norm_b"],
        num_heads=nh, n_win=n_win)

    # spatial interaction + sigmoid gate + conv-branch projection + conv_norm
    x_spatial = window_reverse_nhwc(attn_raw, ws, H, W, C_attn)
    x_cnn_gated = spatial_gate(
        x_spatial.reshape(B, H * W, C_attn), x_cnn.reshape(B, H * W, dim),
        p["projection_w"], p["projection_b"],
        p["si1_w"], p["si1_s"], p["si1_t"], p["si2_w"], p["si2_b"],
        p["conv_norm_s"], p["conv_norm_t"])
    x_cnn_win = window_partition_nhwc(x_cnn_gated.reshape(B, H, W, C_attn), ws)

    # final projection of concat([attn_norm, conv branch]) without the concat
    x = proj_concat(attn_normed.reshape(B_ * N, C_attn),
                    x_cnn_win.reshape(B_ * N, C_attn),
                    p["proj_w_attn"], p["proj_w_cnn"], p["proj_b"])
    return x.reshape(B_, N, dim)


def mixing_block(x, p):
    """x: (B, L, C) with L = H*W and H = W = int(3 * reso * 0.5)."""
    B, L, C = x.shape
    out_dtype = x.dtype
    reso = p["reso"]
    ws = p["window_size"]
    H = W = int(3 * reso * 0.5)
    assert L == H * W, "input sequence length must equal (1.5*reso)**2"

    xs = x.astype(_STORE_DTYPE)
    shortcut = xs
    xn = layernorm(xs.reshape(B * L, C), p["norm1_g"], p["norm1_b"]).reshape(B, H, W, C)

    # reproduce the module's F.pad argument ordering (W padded by pad_b, H by
    # pad_r); with H == W in this module they are interchangeable anyway
    pad_r = (ws - W % ws) % ws
    pad_b = (ws - H % ws) % ws
    if pad_r > 0 or pad_b > 0:
        xn = jnp.pad(xn, ((0, 0), (0, pad_r), (0, pad_b), (0, 0)))
    Hp, Wp = xn.shape[1], xn.shape[2]

    x_windows = window_partition_nhwc(xn, ws)                    # (B_, N, C)
    attn_windows = mixing_attention(x_windows, Hp, Wp, p)
    xr = window_reverse_nhwc(attn_windows, ws, Hp, Wp, C)
    if pad_r > 0 or pad_b > 0:
        xr = xr[:, :H, :W, :]

    xs = shortcut + xr.reshape(B, L, C)

    # norm2 + Mlp + residual fused into a single kernel
    xs = mlp_block(xs.reshape(B * L, C), p["norm2_g"], p["norm2_b"],
                   p["fc1_w"], p["fc1_b"], p["fc2_w"], p["fc2_b"]).reshape(B, L, C)

    y = xs.astype(out_dtype)
    # TODO(synk): the original code reshapes to (B, reso, reso, reso, C), which
    # is shape-inconsistent with L = (1.5*reso)**2 (the torch forward cannot run
    # as written); return the consistent NCHW 2-D reshape instead.
    y_reshape = y.reshape(B, H, W, C).transpose(0, 3, 1, 2)
    return y, y_reshape


# --------------------------------------------------------------------------
# Deterministic parameter init (synthetic, not a checkpoint)
# --------------------------------------------------------------------------

def init_params(key, dim, num_heads, window_size, reso, mlp_ratio=4.0, dwk=3):
    C_attn = dim // 2
    head_dim = C_attn // num_heads
    hidden = int(dim * mlp_ratio)
    d8 = dim // 8
    d16 = dim // 16
    sd = _STORE_DTYPE
    keys = list(jax.random.split(key, 16))

    def w(shape):
        return jax.random.normal(keys.pop(), shape, jnp.float32) * 0.02

    def zeros(c):
        return jnp.zeros((c,), jnp.float32)

    def ones(c):
        return jnp.ones((c,), jnp.float32)

    def bn_fold(c, conv_bias):
        # eval-mode BatchNorm (default running stats: mean=0, var=1, gamma=1,
        # beta=0) folded with the preceding conv bias into a scale/shift pair.
        gamma, beta = ones(c), zeros(c)
        mean, var = zeros(c), ones(c)
        s = gamma / jnp.sqrt(var + _BN_EPS)
        return s, conv_bias * s + (beta - mean * s)

    qkv_w = w((C_attn, 3 * C_attn))
    qkv_b = zeros(3 * C_attn)
    scale = head_dim ** -0.5
    proj_w = w((dim, dim))

    p = dict(
        reso=reso, window_size=window_size, num_heads=num_heads,
        dwconv_kernel_size=dwk,
        norm1_g=ones(dim), norm1_b=zeros(dim),
        norm2_g=ones(dim), norm2_b=zeros(dim),
        proj_attn_w=w((dim, C_attn)).astype(sd), proj_attn_b=zeros(C_attn),
        proj_attn_norm_g=ones(C_attn), proj_attn_norm_b=zeros(C_attn),
        proj_cnn_w=w((dim, dim)).astype(sd), proj_cnn_b=zeros(dim),
        proj_cnn_norm_g=ones(dim), proj_cnn_norm_b=zeros(dim),
        dw_w=w((dwk, dwk, dim)),
        ci1_w=w((dim, d8)),
        ci2_w=w((d8, C_attn)), ci2_b=zeros(C_attn),
        projection_w=w((dim, C_attn)).astype(sd), projection_b=zeros(C_attn),
        # fused-qkv weights, pre-split (q scale head_dim**-0.5 folded into wq/bq)
        wq=(qkv_w[:, :C_attn] * scale).astype(sd),
        wk=qkv_w[:, C_attn:2 * C_attn].astype(sd),
        wv=qkv_w[:, 2 * C_attn:].astype(sd),
        bq=qkv_b[:C_attn] * scale,
        bk=qkv_b[C_attn:2 * C_attn],
        bv=qkv_b[2 * C_attn:],
        si1_w=w((C_attn, d16)).astype(sd),
        si2_w=w((d16, 1)), si2_b=zeros(1),
        attn_norm_g=ones(C_attn), attn_norm_b=zeros(C_attn),
        # final projection weight pre-split for the concat-free proj kernel
        proj_w_attn=proj_w[:C_attn].astype(sd),
        proj_w_cnn=proj_w[C_attn:].astype(sd),
        proj_b=zeros(dim),
        fc1_w=w((dim, hidden)).astype(sd), fc1_b=zeros(hidden),
        fc2_w=w((hidden, dim)).astype(sd), fc2_b=zeros(dim),
    )
    p["dw_s"], p["dw_t"] = bn_fold(dim, zeros(dim))        # dwconv bias = 0 folded
    p["ci1_s"], p["ci1_t"] = bn_fold(d8, zeros(d8))
    p["si1_s"], p["si1_t"] = bn_fold(d16, zeros(d16))
    p["conv_norm_s"], p["conv_norm_t"] = bn_fold(C_attn, zeros(C_attn))

    table = w(((2 * window_size - 1) ** 2, num_heads))     # trunc_normal(0.02)-like
    p["rel_bias"] = rel_pos_bias(table, window_size, num_heads)
    return p


if __name__ == "__main__":
    key = jax.random.PRNGKey(0)
    kp, kx = jax.random.split(key)

    reso = 4            # patches_resolution -> H = W = int(1.5 * reso) = 6
    dim = 16
    num_heads = 2
    window_size = 3
    B = 2
    H = W = int(3 * reso * 0.5)
    L = H * W           # 36

    params = init_params(kp, dim, num_heads, window_size, reso)
    x = jax.random.normal(kx, (B, L, dim), jnp.float32)

    y, y_reshape = mixing_block(x, params)
    jax.block_until_ready((y, y_reshape))

    assert y.shape == (B, L, dim)
    assert y_reshape.shape == (B, dim, H, W)
    assert bool(jnp.all(jnp.isfinite(y)))
    print("KERNEL_OK")
</pallas_src>

<mosaic_0001>
module attributes {stable_mosaic.version = 11 : i64} {
  func.func @k(%arg0: memref<8x128xf32, #tpu.memory_space<vmem>>, %arg1: memref<8x128xf32, #tpu.memory_space<vmem>>) attributes {dimension_semantics = [], scalar_prefetch = 0 : i64, scratch_operands = 0 : i64, tpu.core_type = #tpu.core_type<tc>} {
    %c0 = arith.constant 0 : index
    %c0_0 = arith.constant 0 : index
    %0 = vector.load %arg0[%c0, %c0_0] : memref<8x128xf32, #tpu.memory_space<vmem>>, vector<8x128xf32>
    %1 = math.erf %0 : vector<8x128xf32>
    %c0_1 = arith.constant 0 : index
    %c0_2 = arith.constant 0 : index
    %2 = vector.load %arg1[%c0_1, %c0_2] : memref<8x128xf32, #tpu.memory_space<vmem>>, vector<8x128xf32>
    tpu.vector_store %arg1[%c0_1, %c0_2], %1 {strides = array<i32>} : memref<8x128xf32, #tpu.memory_space<vmem>>, vector<8x128xf32>,
    return
  }
}

module attributes {stable_mosaic.version = 11 : i64} {
  func.func @_ln_kernel(%arg0: i32, %arg1: memref<72x16xbf16, #tpu.memory_space<vmem>>, %arg2: memref<1x16xf32, #tpu.memory_space<vmem>>, %arg3: memref<1x16xf32, #tpu.memory_space<vmem>>, %arg4: memref<72x16xbf16, #tpu.memory_space<vmem>>) attributes {dimension_semantics = [#tpu.dimension_semantics<parallel>], iteration_bounds = array<i64: 1>, scalar_prefetch = 0 : i64, scratch_operands = 0 : i64, tpu.core_type = #tpu.core_type<tc>, window_params = [{transform_indices = @transform_0, window_bounds = array<i64: 72, 16>}, {pipeline_mode = #tpu.pipeline_mode<synchronous>, transform_indices = @transform_1, window_bounds = array<i64: 1, 16>}, {pipeline_mode = #tpu.pipeline_mode<synchronous>, transform_indices = @transform_2, window_bounds = array<i64: 1, 16>}, {transform_indices = @transform_3, window_bounds = array<i64: 72, 16>}]} {
    %c0 = arith.constant 0 : index
    %c0_0 = arith.constant 0 : index
    %0 = vector.load %arg1[%c0, %c0_0] : memref<72x16xbf16, #tpu.memory_space<vmem>>, vector<72x16xbf16>
    %1 = arith.extf %0 : vector<72x16xbf16> to vector<72x16xf32>
    %cst = arith.constant dense<0.000000e+00> : vector<72xf32>
    %2 = vector.multi_reduction <add>, %1, %cst [1] : vector<72x16xf32> to vector<72xf32>
    %3 = vector.shape_cast %2 : vector<72xf32> to vector<72x1xf32>
    %cst_1 = arith.constant 1.600000e+01 : f32
    %4 = vector.broadcast %cst_1 : f32 to vector<72x1xf32>
    %5 = arith.divf %3, %4 : vector<72x1xf32>
    %6 = vector.broadcast %5 : vector<72x1xf32> to vector<72x16xf32>
    %7 = arith.subf %1, %6 : vector<72x16xf32>
    %8 = arith.mulf %7, %7 : vector<72x16xf32>
    %cst_2 = arith.constant dense<0.000000e+00> : vector<72xf32>
    %9 = vector.multi_reduction <add>, %8, %cst_2 [1] : vector<72x16xf32> to vector<72xf32>
    %10 = vector.shape_cast %9 : vector<72xf32> to vector<72x1xf32>
    %cst_3 = arith.constant 1.600000e+01 : f32
    %11 = vector.broadcast %cst_3 : f32 to vector<72x1xf32>
    %12 = arith.divf %10, %11 : vector<72x1xf32>
    %cst_4 = arith.constant 9.99999974E-6 : f32
    %13 = vector.broadcast %cst_4 : f32 to vector<72x1xf32>
    %14 = arith.addf %12, %13 : vector<72x1xf32>
    %15 = math.rsqrt %14 : vector<72x1xf32>
    %16 = vector.broadcast %15 : vector<72x1xf32> to vector<72x16xf32>
    %17 = arith.mulf %7, %16 : vector<72x16xf32>
    %c0_5 = arith.constant 0 : index
    %c0_6 = arith.constant 0 : index
    %18 = vector.load %arg2[%c0_5, %c0_6] : memref<1x16xf32, #tpu.memory_space<vmem>>, vector<1x16xf32>
    %19 = vector.broadcast %18 : vector<1x16xf32> to vector<72x16xf32>
    %20 = arith.mulf %17, %19 : vector<72x16xf32>
    %c0_7 = arith.constant 0 : index
    %c0_8 = arith.constant 0 : index
    %21 = vector.load %arg3[%c0_7, %c0_8] : memref<1x16xf32, #tpu.memory_space<vmem>>, vector<1x16xf32>
    %22 = vector.broadcast %21 : vector<1x16xf32> to vector<72x16xf32>
    %23 = arith.addf %20, %22 : vector<72x16xf32>
    %24 = arith.truncf %23 : vector<72x16xf32> to vector<72x16xbf16>
    %c0_9 = arith.constant 0 : index
    %c0_10 = arith.constant 0 : index
    %25 = vector.load %arg4[%c0_9, %c0_10] : memref<72x16xbf16, #tpu.memory_space<vmem>>, vector<72x16xbf16>
    tpu.vector_store %arg4[%c0_9, %c0_10], %24 {strides = array<i32>} : memref<72x16xbf16, #tpu.memory_space<vmem>>, vector<72x16xbf16>,
    return
  }
  func.func @transform_0(%arg0: i32) -> (i32, i32) {
    %c0_i32 = arith.constant 0 : i32
    %c0_i32_0 = arith.constant 0 : i32
    return %arg0, %c0_i32 : i32, i32
  }
  func.func @transform_1(%arg0: i32) -> (i32, i32) {
    %c0_i32 = arith.constant 0 : i32
    %c0_i32_0 = arith.constant 0 : i32
    %c0_i32_1 = arith.constant 0 : i32
    return %c0_i32, %c0_i32_0 : i32, i32
  }
  func.func @transform_2(%arg0: i32) -> (i32, i32) {
    %c0_i32 = arith.constant 0 : i32
    %c0_i32_0 = arith.constant 0 : i32
    %c0_i32_1 = arith.constant 0 : i32
    return %c0_i32, %c0_i32_0 : i32, i32
  }
  func.func @transform_3(%arg0: i32) -> (i32, i32) {
    %c0_i32 = arith.constant 0 : i32
    %c0_i32_0 = arith.constant 0 : i32
    return %arg0, %c0_i32 : i32, i32
  }
}

</mosaic_0001>

<llo_original>
// kernel: tpu_custom_call.1
$region0: #{tpu_custom_call.1}
  #allocation0 [shape = 'u32[]', space=smem, size = 0x4, offset = 0x4, fixed_abs, tag = 'smem constant byte address 0x4 - core index']
  #allocation1 [shape = 'u32[144,128]{1,0:T(1,128)}', space=vmem, size = 0x12000, scoped, tag = 'internal scratch']
  %s0 = inlined_call_operand.hbm [shape: f32[8,128], index: 0, kind: input, shape index: {}]
  %s1 = inlined_call_operand.hbm [shape: f32[8,128], index: 1, kind: output, shape index: {}]
  %s2 = sld [smem:[#allocation0]]
  $region18: #{tpu_custom_call.1} parent=0
    _
  %s4 = ssub.s32 1, %s2
  %s5 = scalar_select 0, %s4, %s2
  $region1: #{tpu_custom_call.1} parent=0
    #allocation2 [shape = 'u8[4096]{0}', space=vmem, size = 0x1000, scoped, tag = 'input window, operand 0, single buffered']
    #allocation3 [shape = 's32[1]{0}', space=sflag, size = 0x4, scoped, tag = 'scoped memory for tpu_custom_call.1']
    #allocation4 [shape = 's32[1]{0}', space=sflag, size = 0x4, scoped, tag = 'scoped memory for tpu_custom_call.1']
    #allocation5 [shape = 'u8[4096]{0}', space=vmem, size = 0x1000, scoped, tag = 'output window, operand 0, single buffered']
    %6 = vsyncpa [#allocation3], 0
    %7 = vsyncpa [#allocation4], 0
    // Predicated region
    $region2: #{tpu_custom_call.1} parent=1 // pred_check
      _
    $region3: #{tpu_custom_call.1} parent=1 // pred_check_branch
      %9 = sbr.rel (0) target = $region5
    $region4: #{tpu_custom_call.1} parent=1 // pred_region
      %s11 = ssub.s32 128, 128
      %12 = vsyncadd [#allocation3], %s11
      %s14 = sshll.u32 [#allocation2], 4
      %s15 = int_to_ptr.vmem [resolvable:$true] %s14
      %17 = dma.hbm_to_vmem [thread:$0]  %s0, 128, %s15, [#allocation3]
    $region5: #{tpu_custom_call.1} parent=1 // pred_fallthru
      _
    // Predicated region
    $region6: #{tpu_custom_call.1} parent=1 // pred_check
      _
    $region7: #{tpu_custom_call.1} parent=1 // pred_check_branch
      %19 = sbr.rel (0) target = $region9
    $region8: #{tpu_custom_call.1} parent=1 // pred_region
      %20 = dma.done [#allocation3], 128
    $region9: #{tpu_custom_call.1} parent=1 // pred_fallthru
      _
    %v21 = vld [vmem:[#allocation2] sm:$0xff]
    %v22 = verf.f32.pop %v21
    %23 = vst [vmem:[#allocation5] sm:$0xff] %v22
    // Predicated region
    $region10: #{tpu_custom_call.1} parent=1 // pred_check
      _
    $region11: #{tpu_custom_call.1} parent=1 // pred_check_branch
      %25 = sbr.rel (0) target = $region13
    $region12: #{tpu_custom_call.1} parent=1 // pred_region
      %s27 = ssub.s32 128, 128
      %28 = vsyncadd [#allocation4], %s27
      %s30 = sshll.u32 [#allocation5], 4
      %s31 = int_to_ptr.vmem [resolvable:$true] %s30
      %33 = dma.vmem_to_hbm [thread:$0]  %s31, 128, %s1, [#allocation4]
    $region13: #{tpu_custom_call.1} parent=1 // pred_fallthru
      _
    // Predicated region
    $region14: #{tpu_custom_call.1} parent=1 // pred_check
      _
    $region15: #{tpu_custom_call.1} parent=1 // pred_check_branch
      %35 = sbr.rel (0) target = $region17
    $region16: #{tpu_custom_call.1} parent=1 // pred_region
      %36 = dma.done [#allocation4], 128
    $region17: #{tpu_custom_call.1} parent=1 // pred_fallthru
      _
    %37 = vsyncpa [#allocation3], 1
    %38 = vsyncpa [#allocation4], 1

// kernel: tpu_custom_call.1
$region0: #{tpu_custom_call.1}
  #allocation0 [shape = 'u32[]', space=smem, size = 0x4, offset = 0x4, fixed_abs, tag = 'smem constant byte address 0x4 - core index']
  #allocation1 [shape = 'u32[144,128]{1,0:T(1,128)}', space=vmem, size = 0x12000, scoped, tag = 'internal scratch']
  %s0 = inlined_call_operand.hbm [shape: bf16[72,16], index: 0, kind: input, shape index: {}]
  %s1 = inlined_call_operand.hbm [shape: f32[1,16], index: 1, kind: input, shape index: {}]
  %s2 = inlined_call_operand.hbm [shape: f32[1,16], index: 2, kind: input, shape index: {}]
  %s3 = inlined_call_operand.hbm [shape: bf16[72,16], index: 3, kind: output, shape index: {}]
  %s4 = sld [smem:[#allocation0]]
  $region34: #{tpu_custom_call.1} parent=0
    _
  %s6 = ssub.s32 1, %s4
  %s7 = scalar_select 0, %s6, %s4
  $region1: #{tpu_custom_call.1} parent=0
    #allocation2 [shape = 'u8[18432]{0}', space=vmem, size = 0x4800, scoped, tag = 'input window, operand 0, single buffered']
    #allocation3 [shape = 's32[1]{0}', space=sflag, size = 0x4, scoped, tag = 'scoped memory for tpu_custom_call.1']
    #allocation4 [shape = 's32[1]{0}', space=sflag, size = 0x4, scoped, tag = 'scoped memory for tpu_custom_call.1']
    #allocation5 [shape = 'u8[512]{0}', space=vmem, size = 0x400, scoped, tag = 'input window, operand 1, single buffered']
    #allocation6 [shape = 's32[1]{0}', space=sflag, size = 0x4, scoped, tag = 'scoped memory for tpu_custom_call.1']
    #allocation7 [shape = 'u8[512]{0}', space=vmem, size = 0x400, scoped, tag = 'input window, operand 2, single buffered']
    #allocation8 [shape = 'u8[18432]{0}', space=vmem, size = 0x4800, scoped, tag = 'output window, operand 0, single buffered']
    %8 = vsyncpa [#allocation3], 0
    %9 = vsyncpa [#allocation6], 0
    %10 = vsyncpa [#allocation4], 0
    // Predicated region
    $region2: #{tpu_custom_call.1} parent=1 // pred_check
      _
    $region3: #{tpu_custom_call.1} parent=1 // pred_check_branch
      %12 = sbr.rel (0) target = $region5
    $region4: #{tpu_custom_call.1} parent=1 // pred_region
      %s14 = ssub.s32 576, 576
      %15 = vsyncadd [#allocation3], %s14
      %s16 = sshll.u32 [#allocation2], 4
      %s17 = int_to_ptr.vmem [resolvable:$true] %s16
      %22 = dma.hbm_to_vmem [thread:$0]  %s0, 576, %s17, [#allocation3], 64, 64, 4
    $region5: #{tpu_custom_call.1} parent=1 // pred_fallthru
      _
    // Predicated region
    $region6: #{tpu_custom_call.1} parent=1 // pred_check
      _
    $region7: #{tpu_custom_call.1} parent=1 // pred_check_branch
      %24 = sbr.rel (0) target = $region9
    $region8: #{tpu_custom_call.1} parent=1 // pred_region
      %s26 = ssub.s32 16, 16
      %27 = vsyncadd [#allocation6], %s26
      %s29 = sshll.u32 [#allocation5], 4
      %s30 = int_to_ptr.vmem [resolvable:$true] %s29
      %32 = dma.hbm_to_vmem [thread:$0]  %s1, 16, %s30, [#allocation6]
    $region9: #{tpu_custom_call.1} parent=1 // pred_fallthru
      _
    // Predicated region
    $region10: #{tpu_custom_call.1} parent=1 // pred_check
      _
    $region11: #{tpu_custom_call.1} parent=1 // pred_check_branch
      %34 = sbr.rel (0) target = $region13
    $region12: #{tpu_custom_call.1} parent=1 // pred_region
      %s36 = ssub.s32 16, 16
      %37 = vsyncadd [#allocation6], %s36
      %s39 = sshll.u32 [#allocation7], 4
      %s40 = int_to_ptr.vmem [resolvable:$true] %s39
      %42 = dma.hbm_to_vmem [thread:$0]  %s2, 16, %s40, [#allocation6]
    $region13: #{tpu_custom_call.1} parent=1 // pred_fallthru
      _
    // Predicated region
    $region14: #{tpu_custom_call.1} parent=1 // pred_check
      _
    $region15: #{tpu_custom_call.1} parent=1 // pred_check_branch
      %44 = sbr.rel (0) target = $region17
    $region16: #{tpu_custom_call.1} parent=1 // pred_region
      %45 = dma.done [#allocation3], 576
    $region17: #{tpu_custom_call.1} parent=1 // pred_fallthru
      _
    // Predicated region
    $region18: #{tpu_custom_call.1} parent=1 // pred_check
      _
    $region19: #{tpu_custom_call.1} parent=1 // pred_check_branch
      %47 = sbr.rel (0) target = $region21
    $region20: #{tpu_custom_call.1} parent=1 // pred_region
      %48 = dma.done [#allocation6], 16
    $region21: #{tpu_custom_call.1} parent=1 // pred_fallthru
      _
    // Predicated region
    $region22: #{tpu_custom_call.1} parent=1 // pred_check
      _
    $region23: #{tpu_custom_call.1} parent=1 // pred_check_branch
      %50 = sbr.rel (0) target = $region25
    $region24: #{tpu_custom_call.1} parent=1 // pred_region
      %51 = dma.done [#allocation6], 16
    $region25: #{tpu_custom_call.1} parent=1 // pred_fallthru
      _
    %v52 = vld [vmem:[#allocation2] sm:$0xf]
    %v53 = vld [vmem:[#allocation2 + $0x4] sm:$0xf]
    %v54 = vld [vmem:[#allocation2 + $0x8] sm:$0xf]
    %v55 = vld [vmem:[#allocation2 + $0xc] sm:$0xf]
    %v56 = vld [vmem:[#allocation2 + $0x10] sm:$0xf]
    %v57 = vld [vmem:[#allocation2 + $0x14] sm:$0xf]
    %v58 = vld [vmem:[#allocation2 + $0x18] sm:$0xf]
    %v59 = vld [vmem:[#allocation2 + $0x1c] sm:$0xf]
    %v60 = vld [vmem:[#allocation2 + $0x20] sm:$0xf]
    %v61 = vunpack.c.l.bf16 %v52
    %v62 = vunpack.c.l.bf16 %v53
    %v63 = vunpack.c.l.bf16 %v54
    %v64 = vunpack.c.l.bf16 %v55
    %v65 = vunpack.c.l.bf16 %v56
    %v66 = vunpack.c.l.bf16 %v57
    %v67 = vunpack.c.l.bf16 %v58
    %v68 = vunpack.c.l.bf16 %v59
    %v69 = vunpack.c.l.bf16 %v60
    %vm70 = vcmask 130048
    %v71 = vsel %vm70, %v61, 0.0
    %72 = vadd.xlane.f32.xlu0 %v71
    %v73 = vpop.xlane.xlu0 %72
    %v74 = vsel %vm70, %v62, 0.0
    %75 = vadd.xlane.f32.xlu0 %v74
    %v76 = vpop.xlane.xlu0 %75
    %v77 = vsel %vm70, %v63, 0.0
    %78 = vadd.xlane.f32.xlu0 %v77
    %v79 = vpop.xlane.xlu0 %78
    %v80 = vsel %vm70, %v64, 0.0
    %81 = vadd.xlane.f32.xlu0 %v80
    %v82 = vpop.xlane.xlu0 %81
    %v83 = vsel %vm70, %v65, 0.0
    %84 = vadd.xlane.f32.xlu0 %v83
    %v85 = vpop.xlane.xlu0 %84
    %v86 = vsel %vm70, %v66, 0.0
    %87 = vadd.xlane.f32.xlu0 %v86
    %v88 = vpop.xlane.xlu0 %87
    %v89 = vsel %vm70, %v67, 0.0
    %90 = vadd.xlane.f32.xlu0 %v89
    %v91 = vpop.xlane.xlu0 %90
    %v92 = vsel %vm70, %v68, 0.0
    %93 = vadd.xlane.f32.xlu0 %v92
    %v94 = vpop.xlane.xlu0 %93
    %v95 = vsel %vm70, %v69, 0.0
    %96 = vadd.xlane.f32.xlu0 %v95
    %v97 = vpop.xlane.xlu0 %96
    %v98 = vrcp.pop 16.0
    %v99 = vmul.f32 %v73, %v98
    %v100 = vmul.f32 %v76, %v98
    %v101 = vmul.f32 %v79, %v98
    %v102 = vmul.f32 %v82, %v98
    %v103 = vmul.f32 %v85, %v98
    %v104 = vmul.f32 %v88, %v98
    %v105 = vmul.f32 %v91, %v98
    %v106 = vmul.f32 %v94, %v98
    %v107 = vmul.f32 %v97, %v98
    %v108 = vsub.f32 %v61, %v99
    %v109 = vsub.f32 %v62, %v100
    %v110 = vsub.f32 %v63, %v101
    %v111 = vsub.f32 %v64, %v102
    %v112 = vsub.f32 %v65, %v103
    %v113 = vsub.f32 %v66, %v104
    %v114 = vsub.f32 %v67, %v105
    %v115 = vsub.f32 %v68, %v106
    %v116 = vsub.f32 %v69, %v107
    %v117 = vmul.f32 %v108, %v108
    %v118 = vmul.f32 %v109, %v109
    %v119 = vmul.f32 %v110, %v110
    %v120 = vmul.f32 %v111, %v111
    %v121 = vmul.f32 %v112, %v112
    %v122 = vmul.f32 %v113, %v113
    %v123 = vmul.f32 %v114, %v114
    %v124 = vmul.f32 %v115, %v115
    %v125 = vmul.f32 %v116, %v116
    %v126 = vsel %vm70, %v117, 0.0
    %127 = vadd.xlane.f32.xlu0 %v126
    %v128 = vpop.xlane.xlu0 %127
    %v129 = vsel %vm70, %v118, 0.0
    %130 = vadd.xlane.f32.xlu0 %v129
    %v131 = vpop.xlane.xlu0 %130
    %v132 = vsel %vm70, %v119, 0.0
    %133 = vadd.xlane.f32.xlu0 %v132
    %v134 = vpop.xlane.xlu0 %133
    %v135 = vsel %vm70, %v120, 0.0
    %136 = vadd.xlane.f32.xlu0 %v135
    %v137 = vpop.xlane.xlu0 %136
    %v138 = vsel %vm70, %v121, 0.0
    %139 = vadd.xlane.f32.xlu0 %v138
    %v140 = vpop.xlane.xlu0 %139
    %v141 = vsel %vm70, %v122, 0.0
    %142 = vadd.xlane.f32.xlu0 %v141
    %v143 = vpop.xlane.xlu0 %142
    %v144 = vsel %vm70, %v123, 0.0
    %145 = vadd.xlane.f32.xlu0 %v144
    %v146 = vpop.xlane.xlu0 %145
    %v147 = vsel %vm70, %v124, 0.0
    %148 = vadd.xlane.f32.xlu0 %v147
    %v149 = vpop.xlane.xlu0 %148
    %v150 = vsel %vm70, %v125, 0.0
    %151 = vadd.xlane.f32.xlu0 %v150
    %v152 = vpop.xlane.xlu0 %151
    %v153 = vmul.f32 %v128, %v98
    %v154 = vmul.f32 %v131, %v98
    %v155 = vmul.f32 %v134, %v98
    %v156 = vmul.f32 %v137, %v98
    %v157 = vmul.f32 %v140, %v98
    %v158 = vmul.f32 %v143, %v98
    %v159 = vmul.f32 %v146, %v98
    %v160 = vmul.f32 %v149, %v98
    %v161 = vmul.f32 %v152, %v98
    %v162 = vadd.f32 %v153, 1e-05
    %v163 = vadd.f32 %v154, 1e-05
    %v164 = vadd.f32 %v155, 1e-05
    %v165 = vadd.f32 %v156, 1e-05
    %v166 = vadd.f32 %v157, 1e-05
    %v167 = vadd.f32 %v158, 1e-05
    %v168 = vadd.f32 %v159, 1e-05
    %v169 = vadd.f32 %v160, 1e-05
    %v170 = vadd.f32 %v161, 1e-05
    %v171 = vrsqrt.pop %v162
    %v172 = vrsqrt.pop %v163
    %v173 = vrsqrt.pop %v164
    %v174 = vrsqrt.pop %v165
    %v175 = vrsqrt.pop %v166
    %v176 = vrsqrt.pop %v167
    %v177 = vrsqrt.pop %v168
    %v178 = vrsqrt.pop %v169
    %v179 = vrsqrt.pop %v170
    %v180 = vmul.f32 %v108, %v171
    %v181 = vmul.f32 %v109, %v172
    %v182 = vmul.f32 %v110, %v173
    %v183 = vmul.f32 %v111, %v174
    %v184 = vmul.f32 %v112, %v175
    %v185 = vmul.f32 %v113, %v176
    %v186 = vmul.f32 %v114, %v177
    %v187 = vmul.f32 %v115, %v178
    %v188 = vmul.f32 %v116, %v179
    %v189 = vld [vmem:[#allocation5] sm:$0x1]
    %v191 = vlaneseq
    %v192 = vshrl.u32 %v191, 7
    %v193 = vsub.s32 0, %v192
    %v194 = vrot.slane %v189, %v193
    %v196 = vmul.f32 %v180, %v194
    %v197 = vmul.f32 %v181, %v194
    %v198 = vmul.f32 %v182, %v194
    %v199 = vmul.f32 %v183, %v194
    %v200 = vmul.f32 %v184, %v194
    %v201 = vmul.f32 %v185, %v194
    %v202 = vmul.f32 %v186, %v194
    %v203 = vmul.f32 %v187, %v194
    %v204 = vmul.f32 %v188, %v194
    %v205 = vld [vmem:[#allocation7] sm:$0x1]
    %v207 = vlaneseq
    %v208 = vshrl.u32 %v207, 7
    %v209 = vsub.s32 0, %v208
    %v210 = vrot.slane %v205, %v209
    %v212 = vadd.f32 %v196, %v210
    %v213 = vadd.f32 %v197, %v210
    %v214 = vadd.f32 %v198, %v210
    %v215 = vadd.f32 %v199, %v210
    %v216 = vadd.f32 %v200, %v210
    %v217 = vadd.f32 %v201, %v210
    %v218 = vadd.f32 %v202, %v210
    %v219 = vadd.f32 %v203, %v210
    %v220 = vadd.f32 %v204, %v210
    %v221 = vpack.c.bf16 %v213, %v212
    %v222 = vpack.c.bf16 %v215, %v214
    %v223 = vpack.c.bf16 %v217, %v216
    %v224 = vpack.c.bf16 %v219, %v218
    %v225 = vpack.c.bf16 %v220, %v220
    %v231 = vunpack.c.l.b16 %v221
    %v232 = vunpack.c.h.b16 %v221
    %v233 = vunpack.c.l.b16 %v222
    %v234 = vunpack.c.h.b16 %v222
    %v235 = vunpack.c.l.b16 %v223
    %v236 = vunpack.c.h.b16 %v223
    %v237 = vunpack.c.l.b16 %v224
    %v238 = vunpack.c.h.b16 %v224
    %v239 = vunpack.c.l.b16 %v225
    %v240 = vpack.c.b16 %v231, %v231
    %v241 = vpack.c.b16 %v232, %v232
    %v242 = vpack.c.b16 %v233, %v233
    %v243 = vpack.c.b16 %v234, %v234
    %v244 = vpack.c.b16 %v235, %v235
    %v245 = vpack.c.b16 %v236, %v236
    %v246 = vpack.c.b16 %v237, %v237
    %v247 = vpack.c.b16 %v238, %v238
    %v248 = vpack.c.b16 %v239, %v239
    %vm258 = vcmask 125952
    %259 = vst.msk [vmem:[#allocation8] sm:$0xf] %vm258, %v240
    %260 = vst.msk [vmem:[#allocation8 + $0x4] sm:$0xf] %vm258, %v241
    %261 = vst.msk [vmem:[#allocation8 + $0x8] sm:$0xf] %vm258, %v242
    %262 = vst.msk [vmem:[#allocation8 + $0xc] sm:$0xf] %vm258, %v243
    %263 = vst.msk [vmem:[#allocation8 + $0x10] sm:$0xf] %vm258, %v244
    %264 = vst.msk [vmem:[#allocation8 + $0x14] sm:$0xf] %vm258, %v245
    %265 = vst.msk [vmem:[#allocation8 + $0x18] sm:$0xf] %vm258, %v246
    %266 = vst.msk [vmem:[#allocation8 + $0x1c] sm:$0xf] %vm258, %v247
    %267 = vst.msk [vmem:[#allocation8 + $0x20] sm:$0xf] %vm258, %v248
    // Predicated region
    $region26: #{tpu_custom_call.1} parent=1 // pred_check
      _
    $region27: #{tpu_custom_call.1} parent=1 // pred_check_branch
      %269 = sbr.rel (0) target = $region29
    $region28: #{tpu_custom_call.1} parent=1 // pred_region
      %s271 = ssub.s32 576, 576
      %272 = vsyncadd [#allocation4], %s271
      %s273 = sshll.u32 [#allocation8], 4
      %s274 = int_to_ptr.vmem [resolvable:$true] %s273
      %279 = dma.vmem_to_hbm [thread:$0]  %s274, 576, %s3, [#allocation4], 64, 64, 4
    $region29: #{tpu_custom_call.1} parent=1 // pred_fallthru
      _
    // Predicated region
    $region30: #{tpu_custom_call.1} parent=1 // pred_check
      _
    $region31: #{tpu_custom_call.1} parent=1 // pred_check_branch
      %281 = sbr.rel (0) target = $region33
    $region32: #{tpu_custom_call.1} parent=1 // pred_region
      %282 = dma.done [#allocation4], 576
    $region33: #{tpu_custom_call.1} parent=1 // pred_fallthru
      _
    %283 = vsyncpa [#allocation3], 1
    %284 = vsyncpa [#allocation6], 1
    %285 = vsyncpa [#allocation4], 1

</llo_original>
